<compile_context>
chip_gen: v7x
topology: tpu7x:2x2x1
jax: 0.10.0
libtpu: 0.0.40
codegen_flags: <defaults>
</compile_context>

<pallas_src>
import jax
import jax.numpy as jnp
from jax import lax
from jax.experimental import pallas as pl
from jax.experimental.pallas import tpu as pltpu


def _round_up(a, b):
    return (a + b - 1) // b * b


def class_mean_kernel(classes_ref, x_ref, out_ref, sum_ref, cnt_ref):
    """Accumulate per-class sums/counts over the N (reduction) grid axis."""
    n = pl.program_id(1)
    C_pad = out_ref.shape[0]
    tn = x_ref.shape[0]

    @pl.when(n == 0)
    def _init():
        sum_ref[...] = jnp.zeros_like(sum_ref)
        cnt_ref[...] = jnp.zeros_like(cnt_ref)

    cls = classes_ref[...]                                      # (1, tn) int32
    class_ids = lax.broadcasted_iota(jnp.int32, (C_pad, tn), 0)  # (C_pad, tn)
    mask = class_ids == cls                                      # (C_pad, tn) bool

    # One-hot built directly in x.dtype (0/1 exact, even in bf16) -> MXU matmul
    # with f32 accumulation.
    onehot = mask.astype(x_ref.dtype)
    sum_ref[...] += jnp.dot(onehot, x_ref[...],
                            preferred_element_type=jnp.float32)  # (C_pad, td)

    # Counts in f32 from the boolean mask (exact; independent of x.dtype).
    cnt_ref[...] += jnp.sum(mask.astype(jnp.float32), axis=1, keepdims=True)

    @pl.when(n == pl.num_programs(1) - 1)
    def _finalize():
        # diag(1/counts) @ sums == sums / counts.
        # 1/0 -> inf (0/0 -> nan), matching the PyTorch semantics for empty
        # classes; padded class rows are sliced off by the wrapper.
        out_ref[...] = (sum_ref[...] / cnt_ref[...]).astype(out_ref.dtype)


def class_mean(x, classes, n_classes, *, tn=512, td=512):
    """x (N, D) float, classes (N,) int -> (n_classes, D) class means."""
    N, D = x.shape
    dtype = x.dtype

    # Pad the class axis to a sublane multiple so the output store is dense.
    sub = 16 if dtype == jnp.bfloat16 else 8
    C_pad = _round_up(max(n_classes, sub), sub)

    # Lane-dense feature tiles (multiple of 128) and sublane-aligned N tiles.
    td = min(td, _round_up(D, 128))
    D_pad = _round_up(D, td)
    tn = min(tn, _round_up(N, 8))
    N_pad = _round_up(N, tn)

    x_p = x
    if (N_pad, D_pad) != (N, D):
        x_p = jnp.pad(x, ((0, N_pad - N), (0, D_pad - D)))

    cls_p = classes.astype(jnp.int32)
    if N_pad != N:
        # Pad labels with C_pad (outside [0, C_pad)) so padded rows match no class.
        cls_p = jnp.pad(cls_p, (0, N_pad - N), constant_values=C_pad)
    cls2d = cls_p.reshape(1, N_pad)

    grid = (D_pad // td, N_pad // tn)
    itemsize = jnp.dtype(dtype).itemsize
    cost = pl.CostEstimate(
        flops=2 * C_pad * N_pad * D_pad,
        transcendentals=0,
        bytes_accessed=N_pad * D_pad * itemsize
        + C_pad * D_pad * itemsize
        + N_pad * 4,
    )

    out = pl.pallas_call(
        class_mean_kernel,
        out_shape=jax.ShapeDtypeStruct((C_pad, D_pad), dtype),
        grid=grid,
        in_specs=[
            pl.BlockSpec((1, tn), lambda d, n: (0, n)),    # classes (1, N_pad)
            pl.BlockSpec((tn, td), lambda d, n: (n, d)),   # x (N_pad, D_pad)
        ],
        out_specs=pl.BlockSpec((C_pad, td), lambda d, n: (0, d)),
        scratch_shapes=[
            pltpu.VMEM((C_pad, td), jnp.float32),          # per-class sums
            pltpu.VMEM((C_pad, 1), jnp.float32),           # per-class counts
        ],
        compiler_params=pltpu.CompilerParams(
            dimension_semantics=("parallel", "arbitrary"),
        ),
        cost_estimate=cost,
    )(cls2d, x_p)

    return out[:n_classes, :D]


def class_mean_ref(x, classes, n_classes):
    """Plain-JAX reference mirroring the PyTorch forward."""
    index_matrix = jax.nn.one_hot(classes.astype(jnp.int32), n_classes,
                                  dtype=x.dtype).T            # (C, N)
    cases_per_class = index_matrix.sum(axis=1)                # (C,)
    return (index_matrix @ x) / cases_per_class[:, None]


if __name__ == "__main__":
    key = jax.random.PRNGKey(0)
    N, D, C = 8, 32, 4                        # samples, features, classes

    kx, kc = jax.random.split(key)
    x = jax.random.normal(kx, (N, D), dtype=jnp.float32)
    # Deterministic class labels covering every class (avoids 0-count inf/nan).
    classes = jnp.arange(N, dtype=jnp.int32) % C

    out = class_mean(x, classes, C)
    jax.block_until_ready(out)

    ref = class_mean_ref(x, classes, C)
    assert out.shape == (C, D)
    assert jnp.allclose(out, ref, atol=1e-5, rtol=1e-5)

    # Also exercise a multi-tile, padded configuration (N, D not tile-aligned).
    N2, D2, C2 = 100, 200, 5
    x2 = jax.random.normal(kc, (N2, D2), dtype=jnp.float32)
    classes2 = (jnp.arange(N2, dtype=jnp.int32) * 7) % C2
    out2 = class_mean(x2, classes2, C2, tn=64, td=128)
    jax.block_until_ready(out2)
    ref2 = class_mean_ref(x2, classes2, C2)
    assert out2.shape == (C2, D2)
    assert jnp.allclose(out2, ref2, atol=1e-5, rtol=1e-5)

    print("KERNEL_OK")
</pallas_src>

<mosaic_0001>
module attributes {stable_mosaic.version = 11 : i64} {
  func.func @class_mean_kernel(%arg0: i32, %arg1: i32, %arg2: memref<1x8xi32, #tpu.memory_space<vmem>>, %arg3: memref<8x128xf32, #tpu.memory_space<vmem>>, %arg4: memref<8x128xf32, #tpu.memory_space<vmem>>, %arg5: memref<8x128xf32, #tpu.memory_space<vmem>>, %arg6: memref<8x1xf32, #tpu.memory_space<vmem>>) attributes {dimension_semantics = [#tpu.dimension_semantics<parallel>, #tpu.dimension_semantics<arbitrary>], iteration_bounds = array<i64: 1, 1>, scalar_prefetch = 0 : i64, scratch_operands = 2 : i64, tpu.core_type = #tpu.core_type<tc>, window_params = [{transform_indices = @transform_0, window_bounds = array<i64: 1, 8>}, {transform_indices = @transform_1, window_bounds = array<i64: 8, 128>}, {transform_indices = @transform_2, window_bounds = array<i64: 8, 128>}]} {
    %c0_i32 = arith.constant 0 : i32
    %0 = arith.cmpi eq, %arg1, %c0_i32 : i32
    %1 = arith.extui %0 : i1 to i32
    %c0_i32_0 = arith.constant 0 : i32
    %2 = arith.cmpi ne, %1, %c0_i32_0 : i32
    scf.if %2 {
      %cst_15 = arith.constant 0.000000e+00 : f32
      %24 = vector.broadcast %cst_15 : f32 to vector<8x128xf32>
      %c0_16 = arith.constant 0 : index
      %c0_17 = arith.constant 0 : index
      %25 = vector.load %arg5[%c0_16, %c0_17] : memref<8x128xf32, #tpu.memory_space<vmem>>, vector<8x128xf32>
      tpu.vector_store %arg5[%c0_16, %c0_17], %24 {strides = array<i32>} : memref<8x128xf32, #tpu.memory_space<vmem>>, vector<8x128xf32>,
      %cst_18 = arith.constant 0.000000e+00 : f32
      %26 = vector.broadcast %cst_18 : f32 to vector<8x1xf32>
      %c0_19 = arith.constant 0 : index
      %c0_20 = arith.constant 0 : index
      %27 = vector.load %arg6[%c0_19, %c0_20] : memref<8x1xf32, #tpu.memory_space<vmem>>, vector<8x1xf32>
      tpu.vector_store %arg6[%c0_19, %c0_20], %26 {strides = array<i32>} : memref<8x1xf32, #tpu.memory_space<vmem>>, vector<8x1xf32>,
    } else {
    }
    %c0 = arith.constant 0 : index
    %c0_1 = arith.constant 0 : index
    %3 = vector.load %arg2[%c0, %c0_1] : memref<1x8xi32, #tpu.memory_space<vmem>>, vector<1x8xi32>
    %4 = tpu.iota {dimensions = array<i32: 0>} : vector<8x8xi32>
    %5 = vector.broadcast %3 : vector<1x8xi32> to vector<8x8xi32>
    %6 = arith.cmpi eq, %4, %5 : vector<8x8xi32>
    %7 = arith.extui %6 : vector<8x8xi1> to vector<8x8xi32>
    %8 = arith.sitofp %7 : vector<8x8xi32> to vector<8x8xf32>
    %c0_2 = arith.constant 0 : index
    %c0_3 = arith.constant 0 : index
    %9 = vector.load %arg5[%c0_2, %c0_3] : memref<8x128xf32, #tpu.memory_space<vmem>>, vector<8x128xf32>
    %c0_4 = arith.constant 0 : index
    %c0_5 = arith.constant 0 : index
    %10 = vector.load %arg3[%c0_4, %c0_5] : memref<8x128xf32, #tpu.memory_space<vmem>>, vector<8x128xf32>
    %cst = arith.constant dense<0.000000e+00> : vector<8x128xf32>
    %11 = tpu.matmul %8, %10, %cst {dimension_numbers = #tpu.dot_dimension_numbers<[1], [0], [0], [1], [0, 0, 1, 1], [], []>} : vector<8x8xf32>, vector<8x128xf32>, vector<8x128xf32> -> vector<8x128xf32>
    %12 = arith.addf %9, %11 : vector<8x128xf32>
    %c0_6 = arith.constant 0 : index
    %c0_7 = arith.constant 0 : index
    %13 = vector.load %arg5[%c0_6, %c0_7] : memref<8x128xf32, #tpu.memory_space<vmem>>, vector<8x128xf32>
    tpu.vector_store %arg5[%c0_6, %c0_7], %12 {strides = array<i32>} : memref<8x128xf32, #tpu.memory_space<vmem>>, vector<8x128xf32>,
    %c0_8 = arith.constant 0 : index
    %c0_9 = arith.constant 0 : index
    %14 = vector.load %arg6[%c0_8, %c0_9] : memref<8x1xf32, #tpu.memory_space<vmem>>, vector<8x1xf32>
    %15 = arith.extui %6 : vector<8x8xi1> to vector<8x8xi32>
    %16 = arith.sitofp %15 : vector<8x8xi32> to vector<8x8xf32>
    %cst_10 = arith.constant dense<0.000000e+00> : vector<8xf32>
    %17 = vector.multi_reduction <add>, %16, %cst_10 [1] : vector<8x8xf32> to vector<8xf32>
    %18 = vector.shape_cast %17 : vector<8xf32> to vector<8x1xf32>
    %19 = arith.addf %14, %18 : vector<8x1xf32>
    %c0_11 = arith.constant 0 : index
    %c0_12 = arith.constant 0 : index
    %20 = vector.load %arg6[%c0_11, %c0_12] : memref<8x1xf32, #tpu.memory_space<vmem>>, vector<8x1xf32>
    tpu.vector_store %arg6[%c0_11, %c0_12], %19 {strides = array<i32>} : memref<8x1xf32, #tpu.memory_space<vmem>>, vector<8x1xf32>,
    %c0_i32_13 = arith.constant 0 : i32
    %21 = arith.cmpi eq, %arg1, %c0_i32_13 : i32
    %22 = arith.extui %21 : i1 to i32
    %c0_i32_14 = arith.constant 0 : i32
    %23 = arith.cmpi ne, %22, %c0_i32_14 : i32
    scf.if %23 {
      %c0_15 = arith.constant 0 : index
      %c0_16 = arith.constant 0 : index
      %24 = vector.load %arg5[%c0_15, %c0_16] : memref<8x128xf32, #tpu.memory_space<vmem>>, vector<8x128xf32>
      %c0_17 = arith.constant 0 : index
      %c0_18 = arith.constant 0 : index
      %25 = vector.load %arg6[%c0_17, %c0_18] : memref<8x1xf32, #tpu.memory_space<vmem>>, vector<8x1xf32>
      %26 = vector.broadcast %25 : vector<8x1xf32> to vector<8x128xf32>
      %27 = arith.divf %24, %26 : vector<8x128xf32>
      %c0_19 = arith.constant 0 : index
      %c0_20 = arith.constant 0 : index
      %28 = vector.load %arg4[%c0_19, %c0_20] : memref<8x128xf32, #tpu.memory_space<vmem>>, vector<8x128xf32>
      tpu.vector_store %arg4[%c0_19, %c0_20], %27 {strides = array<i32>} : memref<8x128xf32, #tpu.memory_space<vmem>>, vector<8x128xf32>,
    } else {
    }
    return
  }
  func.func @transform_0(%arg0: i32, %arg1: i32) -> (i32, i32) {
    %c0_i32 = arith.constant 0 : i32
    %c0_i32_0 = arith.constant 0 : i32
    return %c0_i32, %arg1 : i32, i32
  }
  func.func @transform_1(%arg0: i32, %arg1: i32) -> (i32, i32) {
    %c0_i32 = arith.constant 0 : i32
    return %arg1, %arg0 : i32, i32
  }
  func.func @transform_2(%arg0: i32, %arg1: i32) -> (i32, i32) {
    %c0_i32 = arith.constant 0 : i32
    %c0_i32_0 = arith.constant 0 : i32
    return %c0_i32, %arg0 : i32, i32
  }
}

</mosaic_0001>

<llo_original>
// kernel: tpu_custom_call.1
$region0: #{tpu_custom_call.1}
  #allocation0 [shape = 'u32[]', space=smem, size = 0x4, offset = 0x4, fixed_abs, tag = 'smem constant byte address 0x4 - core index']
  #allocation1 [shape = 'u32[144,128]{1,0:T(1,128)}', space=vmem, size = 0x12000, scoped, tag = 'internal scratch']
  #allocation2 [shape = 'f32[8,128]{1,0:T(8,128)}', space=vmem, size = 0x1000, scoped, tag = 'scratch operand']
  #allocation3 [shape = 'f32[8,1]{1,0:T(8,128)}', space=vmem, size = 0x1000, scoped, tag = 'scratch operand']
  %s0 = inlined_call_operand.hbm [shape: s32[1,8], index: 0, kind: input, shape index: {}]
  %s1 = inlined_call_operand.hbm [shape: f32[8,128], index: 1, kind: input, shape index: {}]
  %s2 = inlined_call_operand.hbm [shape: f32[8,128], index: 2, kind: output, shape index: {}]
  %s3 = sld [smem:[#allocation0]]
  $region34: #{tpu_custom_call.1} parent=0
    _
  %s5 = ssub.s32 1, %s3
  %s6 = scalar_select 0, %s5, %s3
  $region1: #{tpu_custom_call.1} parent=0
    #allocation4 [shape = 'u8[512]{0}', space=vmem, size = 0x400, scoped, tag = 'input window, operand 0, single buffered']
    #allocation5 [shape = 's32[1]{0}', space=sflag, size = 0x4, scoped, tag = 'scoped memory for tpu_custom_call.1']
    #allocation6 [shape = 's32[1]{0}', space=sflag, size = 0x4, scoped, tag = 'scoped memory for tpu_custom_call.1']
    #allocation7 [shape = 'u8[4096]{0}', space=vmem, size = 0x1000, scoped, tag = 'input window, operand 1, single buffered']
    #allocation8 [shape = 's32[1]{0}', space=sflag, size = 0x4, scoped, tag = 'scoped memory for tpu_custom_call.1']
    #allocation9 [shape = 'u8[4096]{0}', space=vmem, size = 0x1000, scoped, tag = 'output window, operand 0, single buffered']
    %7 = vsyncpa [#allocation5], 0
    %8 = vsyncpa [#allocation8], 0
    %9 = vsyncpa [#allocation6], 0
    // Predicated region
    $region2: #{tpu_custom_call.1} parent=1 // pred_check
      _
    $region3: #{tpu_custom_call.1} parent=1 // pred_check_branch
      %11 = sbr.rel (0) target = $region5
    $region4: #{tpu_custom_call.1} parent=1 // pred_region
      %s13 = ssub.s32 16, 16
      %14 = vsyncadd [#allocation5], %s13
      %s16 = sshll.u32 [#allocation4], 4
      %s17 = int_to_ptr.vmem [resolvable:$true] %s16
      %19 = dma.hbm_to_vmem [thread:$0]  %s0, 16, %s17, [#allocation5]
    $region5: #{tpu_custom_call.1} parent=1 // pred_fallthru
      _
    // Predicated region
    $region6: #{tpu_custom_call.1} parent=1 // pred_check
      _
    $region7: #{tpu_custom_call.1} parent=1 // pred_check_branch
      %21 = sbr.rel (0) target = $region9
    $region8: #{tpu_custom_call.1} parent=1 // pred_region
      %s23 = ssub.s32 128, 128
      %24 = vsyncadd [#allocation8], %s23
      %s26 = sshll.u32 [#allocation7], 4
      %s27 = int_to_ptr.vmem [resolvable:$true] %s26
      %29 = dma.hbm_to_vmem [thread:$0]  %s1, 128, %s27, [#allocation8]
    $region9: #{tpu_custom_call.1} parent=1 // pred_fallthru
      _
    // Predicated region
    $region10: #{tpu_custom_call.1} parent=1 // pred_check
      _
    $region11: #{tpu_custom_call.1} parent=1 // pred_check_branch
      %31 = sbr.rel (0) target = $region13
    $region12: #{tpu_custom_call.1} parent=1 // pred_region
      %32 = dma.done [#allocation5], 16
    $region13: #{tpu_custom_call.1} parent=1 // pred_fallthru
      _
    // Predicated region
    $region14: #{tpu_custom_call.1} parent=1 // pred_check
      _
    $region15: #{tpu_custom_call.1} parent=1 // pred_check_branch
      %34 = sbr.rel (0) target = $region17
    $region16: #{tpu_custom_call.1} parent=1 // pred_region
      %35 = dma.done [#allocation8], 128
    $region17: #{tpu_custom_call.1} parent=1 // pred_fallthru
      _
    %p36 = scmp.eq.s32.totalorder 0, 0
    // Predicated region
    $region18: #{tpu_custom_call.1} parent=1 // pred_check
      %p37 = pneg %p36
    $region19: #{tpu_custom_call.1} parent=1 // pred_check_branch
      %39 = sbr.rel (%p37) target = $region21
    $region20: #{tpu_custom_call.1} parent=1 // pred_region
      %40 = vst [vmem:[#allocation2] sm:$0xff] 0.0
      %vm41 = vcmask 7168
      %42 = vst.msk [vmem:[#allocation3] sm:$0xff] %vm41, 0.0
    $region21: #{tpu_custom_call.1} parent=1 // pred_fallthru
      _
    %v43 = vld [vmem:[#allocation4] sm:$0x1]
    %v44 = vlaneseq
    %v45 = vshrl.u32 %v44, 7
    %v46 = vlaneseq
    %v47 = vshrl.u32 %v46, 7
    %v48 = vsub.s32 0, %v47
    %v49 = vrot.slane %v43, %v48
    %vm50 = vcmp.eq.s32.totalorder %v45, %v49
    %v51 = vsel %vm50, 1, 0
    %v52 = vcvt.s32.f32 %v51
    %v53 = vld [vmem:[#allocation2] sm:$0xff]
    %v54 = vld [vmem:[#allocation7] sm:$0xff]
    %vm55 = vcmask 64512
    %v57 = vsel %vm55, %v52, 0
    %59 = vmatprep.subr.mxu0 0.0
    %60 = vmatpush1.msra.mxu0 %v54
    %61 = vmatprep.subr.mxu0 0.0
    %62 = vmatpush1.msra.mxu0 0.0
    %63 = vmatprep.subr.mxu0 0.0
    %64 = vmatpush1.msra.mxu0 0.0
    %65 = vmatprep.subr.mxu0 0.0
    %66 = vmatpush1.msra.mxu0 0.0
    %67 = vmatprep.subr.mxu0 0.0
    %68 = vmatpush1.msra.mxu0 0.0
    %69 = vmatprep.subr.mxu0 0.0
    %70 = vmatpush1.msra.mxu0 0.0
    %71 = vmatprep.subr.mxu0 0.0
    %72 = vmatpush1.msra.mxu0 0.0
    %73 = vmatprep.subr.mxu0 0.0
    %74 = vmatpush1.msra.mxu0 0.0
    %75 = vmatprep.subr.mxu0 0.0
    %76 = vmatpush1.msra.mxu0 0.0
    %77 = vmatprep.subr.mxu0 0.0
    %78 = vmatpush1.msra.mxu0 0.0
    %79 = vmatprep.subr.mxu0 0.0
    %80 = vmatpush1.msra.mxu0 0.0
    %81 = vmatprep.subr.mxu0 0.0
    %82 = vmatpush1.msra.mxu0 0.0
    %83 = vmatprep.subr.mxu0 0.0
    %84 = vmatpush1.msra.mxu0 0.0
    %85 = vmatprep.subr.mxu0 0.0
    %86 = vmatpush1.msra.mxu0 0.0
    %87 = vmatprep.subr.mxu0 0.0
    %88 = vmatpush1.msra.mxu0 0.0
    %89 = vmatprep.subr.mxu0 0.0
    %90 = vmatpush1.msra.mxu0 0.0
    %91 = vmatprep.subr.mxu0 0.0
    %92 = vmatpush1.msra.mxu0 0.0
    %93 = vmatprep.subr.mxu0 0.0
    %94 = vmatpush1.msra.mxu0 0.0
    %95 = vmatprep.subr.mxu0 0.0
    %96 = vmatpush1.msra.mxu0 0.0
    %97 = vmatprep.subr.mxu0 0.0
    %98 = vmatpush1.msra.mxu0 0.0
    %99 = vmatprep.subr.mxu0 0.0
    %100 = vmatpush1.msra.mxu0 0.0
    %101 = vmatprep.subr.mxu0 0.0
    %102 = vmatpush1.msra.mxu0 0.0
    %103 = vmatprep.subr.mxu0 0.0
    %104 = vmatpush1.msra.mxu0 0.0
    %105 = vmatprep.subr.mxu0 0.0
    %106 = vmatpush1.msra.mxu0 0.0
    %107 = vmatprep.subr.mxu0 0.0
    %108 = vmatpush1.msra.mxu0 0.0
    %109 = vmatprep.subr.mxu0 0.0
    %110 = vmatpush1.msra.mxu0 0.0
    %111 = vmatprep.subr.mxu0 0.0
    %112 = vmatpush1.msra.mxu0 0.0
    %113 = vmatprep.subr.mxu0 0.0
    %114 = vmatpush1.msra.mxu0 0.0
    %115 = vmatprep.subr.mxu0 0.0
    %116 = vmatpush1.msra.mxu0 0.0
    %117 = vmatprep.subr.mxu0 0.0
    %118 = vmatpush1.msra.mxu0 0.0
    %119 = vmatprep.subr.mxu0 0.0
    %120 = vmatpush1.msra.mxu0 0.0
    %121 = vmatprep.subr.mxu0 0.0
    %122 = vmatpush1.msra.mxu0 0.0
    %123 = vmatprep.mubr.f32.mxu0 0.0
    %124 = vmatmul.mubr.f32.gmra.mrb[0].mxu0 %v57
    %v125 = vpop.f32.mrb[0].mxu0
    %v126 = vadd.f32 0.0, %v125
    %v127 = vpop.f32.mrb[0].mxu0
    %128 = vdwg.mxu0
    %v129 = vadd.f32 %v53, %v126
    %130 = vst [vmem:[#allocation2] sm:$0xff] %v129
    %v131 = vld [vmem:[#allocation3] sm:$0xff]
    %v132 = vsel %vm55, %v52, 0.0
    %133 = vadd.xlane.f32.xlu0 %v132
    %v134 = vpop.xlane.xlu0 %133
    %v135 = vadd.f32 %v131, %v134
    %vm136 = vcmask 7168
    %137 = vst.msk [vmem:[#allocation3] sm:$0xff] %vm136, %v135
    // Predicated region
    $region22: #{tpu_custom_call.1} parent=1 // pred_check
      %p138 = pneg %p36
    $region23: #{tpu_custom_call.1} parent=1 // pred_check_branch
      %140 = sbr.rel (%p138) target = $region25
    $region24: #{tpu_custom_call.1} parent=1 // pred_region
      %v141 = vld [vmem:[#allocation2] sm:$0xff]
      %v142 = vld [vmem:[#allocation3] sm:$0xff]
      %144 = vset.pattern.permute.xlu0 0
      %145 = vperm.xlu0 %144, %v142
      %v146 = vpop.permute.xlu0 %145
      %v148 = vrcp.pop %v146
      %v149 = vmul.f32 %v141, %v148
      %150 = vst [vmem:[#allocation9] sm:$0xff] %v149
    $region25: #{tpu_custom_call.1} parent=1 // pred_fallthru
      _
    // Predicated region
    $region26: #{tpu_custom_call.1} parent=1 // pred_check
      _
    $region27: #{tpu_custom_call.1} parent=1 // pred_check_branch
      %152 = sbr.rel (0) target = $region29
    $region28: #{tpu_custom_call.1} parent=1 // pred_region
      %s154 = ssub.s32 128, 128
      %155 = vsyncadd [#allocation6], %s154
      %s157 = sshll.u32 [#allocation9], 4
      %s158 = int_to_ptr.vmem [resolvable:$true] %s157
      %160 = dma.vmem_to_hbm [thread:$0]  %s158, 128, %s2, [#allocation6]
    $region29: #{tpu_custom_call.1} parent=1 // pred_fallthru
      _
    // Predicated region
    $region30: #{tpu_custom_call.1} parent=1 // pred_check
      _
    $region31: #{tpu_custom_call.1} parent=1 // pred_check_branch
      %162 = sbr.rel (0) target = $region33
    $region32: #{tpu_custom_call.1} parent=1 // pred_region
      %163 = dma.done [#allocation6], 128
    $region33: #{tpu_custom_call.1} parent=1 // pred_fallthru
      _
    %164 = vsyncpa [#allocation5], 1
    %165 = vsyncpa [#allocation8], 1
    %166 = vsyncpa [#allocation6], 1

</llo_original>
